<compile_context>
chip_gen: v5e
topology: v5e:2x2
jax: 0.10.0
libtpu: 0.0.40
codegen_flags: <defaults>
</compile_context>

<pallas_src>
import math

import jax
import jax.numpy as jnp
from jax.experimental import pallas as pl
from jax.experimental.pallas import tpu as pltpu


def _round_up(a, b):
    return (a + b - 1) // b * b


def _mlm_head_kernel(x_ref, w1_ref, b1_ref, gamma_ref, beta_ref,
                     emb_ref, b2_ref, o_ref, h_ref):
    # grid = (M//tm, V//tn); axis 0 = row blocks (parallel), axis 1 = vocab
    # tiles (arbitrary, innermost).  h_ref caches the transformed activations
    # for the current row block across all vocab tiles.
    @pl.when(pl.program_id(1) == 0)
    def _():
        # dense (H -> H): MXU operands in wrapper-chosen dtype, f32 accumulate
        h = jnp.dot(x_ref[...], w1_ref[...],
                    preferred_element_type=jnp.float32)
        h = h + b1_ref[...].astype(jnp.float32)
        # transform_act_fn = gelu (exact erf form, matching BERT ACT2FN['gelu'])
        h = 0.5 * h * (1.0 + jax.lax.erf(h * (1.0 / math.sqrt(2.0))))
        # LayerNorm over last dim, eps = 1e-12, statistics in f32
        mean = jnp.mean(h, axis=-1, keepdims=True)
        c = h - mean
        var = jnp.mean(c * c, axis=-1, keepdims=True)
        h = c * jax.lax.rsqrt(var + 1e-12)
        h = (h * gamma_ref[...].astype(jnp.float32)
             + beta_ref[...].astype(jnp.float32))
        h_ref[...] = h.astype(h_ref.dtype)

    # decoder: h @ E_tile + b2_tile  (dominant MXU work), f32 accumulate
    out = jnp.dot(h_ref[...], emb_ref[...], preferred_element_type=jnp.float32)
    out = out + b2_ref[...].astype(jnp.float32)
    o_ref[...] = out.astype(o_ref.dtype)


def _const_spec(shape, index_map):
    """BlockSpec for a constant-index operand: single-buffered to save VMEM."""
    try:
        return pl.BlockSpec(shape, index_map, pipeline_mode=pl.Buffered(1))
    except (TypeError, AttributeError):
        # Older jax without pipeline_mode / Buffered -> default double buffering.
        return pl.BlockSpec(shape, index_map)


def visual_only_mlm_head(x, w1, b1, gamma, beta, emb_w, bias, *,
                         tile_m=1024, tile_v=1024, mxu_dtype=jnp.bfloat16,
                         out_dtype=None,
                         resident_e_max_bytes=16 * 1024 * 1024,
                         vmem_limit_bytes=None):
    """x: (B, S, H) -> (B, S, V).

    tile_m: row-block size, the PRIMARY tuning knob (512-1024 recommended on
            v5e/v6e/v7x alike; it sets the arithmetic intensity of the E
            stream).  Automatically shrunk if the tile footprint exceeds the
            device VMEM budget.
    tile_v: vocab-tile size when the embedding is streamed (multiple of 128);
            ignored when the whole embedding is kept resident in VMEM.
    mxu_dtype: dtype for MXU operands (bf16 recommended); None keeps the
               input dtype (exact f32 path).
    out_dtype: output dtype (bf16 halves the M x V HBM write); defaults to
               x.dtype.
    NOTE: for best perf, pre-cast W1/E to bf16 once outside the jitted call
    so the cast is not repeated per invocation.
    """
    B, S, H = x.shape
    H2, V = emb_w.shape
    assert H2 == H, (H2, H)
    if out_dtype is None:
        out_dtype = x.dtype
    M = B * S

    # Cast MXU operands BEFORE any padding (pads then run at narrow width).
    x2 = x.reshape(M, H)
    if mxu_dtype is not None:
        x2 = x2.astype(mxu_dtype)
        w1_k = w1.astype(mxu_dtype)
        emb = emb_w.astype(mxu_dtype)
        h_dtype = jnp.dtype(mxu_dtype)
    else:
        w1_k = w1
        emb = emb_w
        h_dtype = jnp.dtype(jnp.float32)

    in_b = jnp.dtype(x2.dtype).itemsize
    w_b = jnp.dtype(w1_k.dtype).itemsize
    out_b = jnp.dtype(out_dtype).itemsize
    h_b = h_dtype.itemsize

    # ---------------- tile selection (generation-aware VMEM budget) --------
    try:
        vmem_capacity = pltpu.get_tpu_info().vmem_capacity_bytes
    except Exception:
        vmem_capacity = 64 * 1024 * 1024  # conservative fallback (v7x per-TC)
    budget = int(0.8 * vmem_capacity)

    def vmem_est(tm_, tn_, n_v_tiles_):
        e_bufs = 1 if n_v_tiles_ == 1 else 2
        return (2 * tm_ * H * in_b          # x row block (double buffered)
                + H * H * w_b               # W1 (single buffered)
                + 3 * H * 4                 # b1 / gamma / beta (f32, single)
                + e_bufs * H * tn_ * w_b    # embedding tile(s)
                + e_bufs * tn_ * 4          # decoder bias tile(s)
                + 2 * tm_ * tn_ * out_b     # output tile (double buffered)
                + tm_ * H * h_b)            # cached transform scratch

    def pick_streaming_tn():
        t = min(tile_v, V128)
        t = max(128, t - t % 128)
        while V128 % t != 0:     # divisor of V128 -> no extra vocab padding
            t -= 128
        return t

    V128 = _round_up(V, 128)
    tm = min(tile_m, _round_up(M, 8))

    # Resident-E path: whole (padded) embedding lives in VMEM, DMA'd once.
    resident = H * V128 * w_b <= min(resident_e_max_bytes, budget // 2)
    tn = V128 if resident else pick_streaming_tn()
    n_v_tiles = 1 if resident else V128 // tn

    while vmem_est(tm, tn, n_v_tiles) > budget and tm > 256:
        tm //= 2
    if resident and vmem_est(tm, tn, 1) > budget:
        # Resident E doesn't fit even with a small row block -> stream it.
        resident = False
        tn = pick_streaming_tn()
        n_v_tiles = V128 // tn
        while vmem_est(tm, tn, n_v_tiles) > budget and tm > 256:
            tm //= 2
    tm = max(8, tm - tm % 8)

    V_pad = V128                      # tn always divides V128
    M_pad = _round_up(M, tm)
    n_row_blocks = M_pad // tm
    n_v_tiles = V_pad // tn

    # ---------------- padding (only when shapes are ragged) ----------------
    if M_pad != M:
        # Padded rows go through GELU/LN and are sliced away below; they are
        # never consumed.
        x2 = jnp.pad(x2, ((0, M_pad - M), (0, 0)))
    b2 = bias
    if V_pad != V:
        emb = jnp.pad(emb, ((0, 0), (0, V_pad - V)))
        b2 = jnp.pad(b2, (0, V_pad - V))

    # Small per-channel params stay f32 (elementwise math is f32 everywhere).
    b1_2 = b1.reshape(1, H).astype(jnp.float32)
    gamma_2 = gamma.reshape(1, H).astype(jnp.float32)
    beta_2 = beta.reshape(1, H).astype(jnp.float32)
    b2_2 = b2.reshape(1, V_pad).astype(jnp.float32)

    grid = (n_row_blocks, n_v_tiles)

    # Advisory cost estimate; E is re-streamed once per row block unless the
    # resident (single-vocab-tile) path is taken.
    emb_reads = 1 if n_v_tiles == 1 else n_row_blocks
    flops = 2 * M_pad * H * H + 2 * M_pad * H * V_pad
    bytes_accessed = int(
        x2.size * in_b
        + w1_k.size * w_b
        + emb.size * w_b * emb_reads
        + M_pad * V_pad * out_b
        + 4 * (3 * H + V_pad))
    cost = pl.CostEstimate(flops=int(flops), transcendentals=int(M_pad * H),
                           bytes_accessed=bytes_accessed)

    if vmem_limit_bytes is None:
        est = vmem_est(tm, tn, n_v_tiles)
        # est already includes the double-buffer factors; just add headroom
        # for Mosaic internal scratch and clamp to the device budget.
        vmem_limit_bytes = int(min(budget, max(est + (4 << 20), 16 << 20)))

    if n_v_tiles == 1:
        emb_spec = _const_spec((H, tn), lambda i, j: (0, 0))
        b2_spec = _const_spec((1, tn), lambda i, j: (0, 0))
    else:
        emb_spec = pl.BlockSpec((H, tn), lambda i, j: (0, j))
        b2_spec = pl.BlockSpec((1, tn), lambda i, j: (0, j))

    out = pl.pallas_call(
        _mlm_head_kernel,
        out_shape=jax.ShapeDtypeStruct((M_pad, V_pad), out_dtype),
        grid_spec=pltpu.PrefetchScalarGridSpec(
            num_scalar_prefetch=0,
            grid=grid,
            in_specs=[
                pl.BlockSpec((tm, H), lambda i, j: (i, 0)),   # x row block
                # TODO(synk): for H >= 4096 add a K-tiled dense path so the
                # full (H, H) W1 block does not crowd v7x's 64 MiB VMEM.
                _const_spec((H, H), lambda i, j: (0, 0)),     # dense weight
                _const_spec((1, H), lambda i, j: (0, 0)),     # dense bias
                _const_spec((1, H), lambda i, j: (0, 0)),     # LN gamma
                _const_spec((1, H), lambda i, j: (0, 0)),     # LN beta
                emb_spec,                                     # embedding tile
                b2_spec,                                      # decoder bias
            ],
            out_specs=pl.BlockSpec((tm, tn), lambda i, j: (i, j)),
            scratch_shapes=[pltpu.VMEM((tm, H), h_dtype)],    # cached transform
        ),
        compiler_params=pltpu.CompilerParams(
            # TODO(synk): verify axis 0 actually shards across both v7x
            # TensorCores; switch to pltpu.CORE_PARALLEL if one TC sits idle.
            dimension_semantics=("parallel", "arbitrary"),
            vmem_limit_bytes=vmem_limit_bytes),
        cost_estimate=cost,
    )(x2, w1_k, b1_2, gamma_2, beta_2, emb, b2_2)

    if M_pad == M and V_pad == V:
        return out.reshape(B, S, V)
    return out[:M, :V].reshape(B, S, V)


def _reference(x, w1, b1, gamma, beta, emb_w, bias):
    h = jnp.einsum("bsh,hk->bsk", x, w1) + b1
    h = 0.5 * h * (1.0 + jax.lax.erf(h / jnp.sqrt(2.0)))
    mean = jnp.mean(h, axis=-1, keepdims=True)
    var = jnp.mean((h - mean) ** 2, axis=-1, keepdims=True)
    h = (h - mean) * jax.lax.rsqrt(var + 1e-12) * gamma + beta
    return jnp.einsum("bsh,hv->bsv", h, emb_w) + bias


if __name__ == "__main__":
    # Small shapes consistent with the module's forward:
    #   sequence_output: (batch=2, seq=8, hidden=32)
    #   visual_model_embedding_weights: (hidden=32, visual_vocab=64)
    B, S, H, V = 2, 8, 32, 64

    key = jax.random.PRNGKey(0)
    k = jax.random.split(key, 7)
    x = jax.random.normal(k[0], (B, S, H), dtype=jnp.float32)
    # dense weight stored as (H_in, H_out) so the kernel computes x @ w1
    w1 = jax.random.normal(k[1], (H, H), dtype=jnp.float32) * 0.05
    b1 = jax.random.normal(k[2], (H,), dtype=jnp.float32) * 0.01
    gamma = 1.0 + 0.1 * jax.random.normal(k[3], (H,), dtype=jnp.float32)
    beta = 0.1 * jax.random.normal(k[4], (H,), dtype=jnp.float32)
    emb_w = jax.random.normal(k[5], (H, V), dtype=jnp.float32) * 0.05
    bias = jnp.zeros((V,), dtype=jnp.float32)  # nn.Parameter(torch.zeros(V))

    ref = _reference(x, w1, b1, gamma, beta, emb_w, bias)

    # Exact path: f32 MXU operands -> tight tolerance against the f32 spec.
    out_f32 = visual_only_mlm_head(x, w1, b1, gamma, beta, emb_w, bias,
                                   mxu_dtype=None)
    out_f32 = jax.block_until_ready(out_f32)
    assert out_f32.shape == (B, S, V), out_f32.shape
    assert jnp.allclose(out_f32, ref, atol=1e-4, rtol=1e-4), \
        float(jnp.max(jnp.abs(out_f32 - ref)))

    # Production path: bf16 MXU operands, f32 accumulation / f32 LN stats.
    out_bf16 = visual_only_mlm_head(x, w1, b1, gamma, beta, emb_w, bias,
                                    mxu_dtype=jnp.bfloat16)
    out_bf16 = jax.block_until_ready(out_bf16)
    assert out_bf16.shape == (B, S, V), out_bf16.shape
    assert jnp.allclose(out_bf16, ref, atol=2e-2, rtol=2e-2), \
        float(jnp.max(jnp.abs(out_bf16 - ref)))

    # bf16 output path (halves the dominant M x V HBM write).
    out_bf16o = visual_only_mlm_head(x, w1, b1, gamma, beta, emb_w, bias,
                                     mxu_dtype=jnp.bfloat16,
                                     out_dtype=jnp.bfloat16)
    out_bf16o = jax.block_until_ready(out_bf16o)
    assert out_bf16o.shape == (B, S, V), out_bf16o.shape
    assert out_bf16o.dtype == jnp.bfloat16
    assert jnp.allclose(out_bf16o.astype(jnp.float32), ref,
                        atol=5e-2, rtol=5e-2), \
        float(jnp.max(jnp.abs(out_bf16o.astype(jnp.float32) - ref)))

    print("KERNEL_OK")
</pallas_src>

<mosaic_0001>
module attributes {stable_mosaic.version = 11 : i64} {
  func.func @_mlm_head_kernel(%arg0: i32, %arg1: i32, %arg2: memref<16x32xf32, #tpu.memory_space<vmem>>, %arg3: memref<32x32xf32, #tpu.memory_space<vmem>>, %arg4: memref<1x32xf32, #tpu.memory_space<vmem>>, %arg5: memref<1x32xf32, #tpu.memory_space<vmem>>, %arg6: memref<1x32xf32, #tpu.memory_space<vmem>>, %arg7: memref<32x128xf32, #tpu.memory_space<vmem>>, %arg8: memref<1x128xf32, #tpu.memory_space<vmem>>, %arg9: memref<16x128xf32, #tpu.memory_space<vmem>>, %arg10: memref<16x32xf32, #tpu.memory_space<vmem>>) attributes {dimension_semantics = [#tpu.dimension_semantics<parallel>, #tpu.dimension_semantics<arbitrary>], iteration_bounds = array<i64: 1, 1>, scalar_prefetch = 0 : i64, scratch_operands = 1 : i64, tpu.core_type = #tpu.core_type<tc>, window_params = [{transform_indices = @transform_0, window_bounds = array<i64: 16, 32>}, {pipeline_mode = #tpu.pipeline_mode<synchronous>, transform_indices = @transform_1, window_bounds = array<i64: 32, 32>}, {pipeline_mode = #tpu.pipeline_mode<synchronous>, transform_indices = @transform_2, window_bounds = array<i64: 1, 32>}, {pipeline_mode = #tpu.pipeline_mode<synchronous>, transform_indices = @transform_3, window_bounds = array<i64: 1, 32>}, {pipeline_mode = #tpu.pipeline_mode<synchronous>, transform_indices = @transform_4, window_bounds = array<i64: 1, 32>}, {pipeline_mode = #tpu.pipeline_mode<synchronous>, transform_indices = @transform_5, window_bounds = array<i64: 32, 128>}, {pipeline_mode = #tpu.pipeline_mode<synchronous>, transform_indices = @transform_6, window_bounds = array<i64: 1, 128>}, {transform_indices = @transform_7, window_bounds = array<i64: 16, 128>}]} {
    %c0_i32 = arith.constant 0 : i32
    %0 = arith.cmpi eq, %arg1, %c0_i32 : i32
    %1 = arith.extui %0 : i1 to i32
    %c0_i32_0 = arith.constant 0 : i32
    %2 = arith.cmpi ne, %1, %c0_i32_0 : i32
    scf.if %2 {
      %c0_8 = arith.constant 0 : index
      %c0_9 = arith.constant 0 : index
      %10 = vector.load %arg2[%c0_8, %c0_9] : memref<16x32xf32, #tpu.memory_space<vmem>>, vector<16x32xf32>
      %c0_10 = arith.constant 0 : index
      %c0_11 = arith.constant 0 : index
      %11 = vector.load %arg3[%c0_10, %c0_11] : memref<32x32xf32, #tpu.memory_space<vmem>>, vector<32x32xf32>
      %cst_12 = arith.constant dense<0.000000e+00> : vector<16x32xf32>
      %12 = tpu.matmul %10, %11, %cst_12 {dimension_numbers = #tpu.dot_dimension_numbers<[1], [0], [0], [1], [0, 0, 1, 1], [], []>} : vector<16x32xf32>, vector<32x32xf32>, vector<16x32xf32> -> vector<16x32xf32>
      %c0_13 = arith.constant 0 : index
      %c0_14 = arith.constant 0 : index
      %13 = vector.load %arg4[%c0_13, %c0_14] : memref<1x32xf32, #tpu.memory_space<vmem>>, vector<1x32xf32>
      %14 = vector.broadcast %13 : vector<1x32xf32> to vector<16x32xf32>
      %15 = arith.addf %12, %14 : vector<16x32xf32>
      %cst_15 = arith.constant 5.000000e-01 : f32
      %16 = vector.broadcast %cst_15 : f32 to vector<16x32xf32>
      %17 = arith.mulf %16, %15 : vector<16x32xf32>
      %cst_16 = arith.constant 0.707106769 : f32
      %18 = vector.broadcast %cst_16 : f32 to vector<16x32xf32>
      %19 = arith.mulf %15, %18 : vector<16x32xf32>
      %20 = math.erf %19 : vector<16x32xf32>
      %cst_17 = arith.constant 1.000000e+00 : f32
      %21 = vector.broadcast %cst_17 : f32 to vector<16x32xf32>
      %22 = arith.addf %21, %20 : vector<16x32xf32>
      %23 = arith.mulf %17, %22 : vector<16x32xf32>
      %cst_18 = arith.constant dense<0.000000e+00> : vector<16xf32>
      %24 = vector.multi_reduction <add>, %23, %cst_18 [1] : vector<16x32xf32> to vector<16xf32>
      %25 = vector.shape_cast %24 : vector<16xf32> to vector<16x1xf32>
      %cst_19 = arith.constant 3.200000e+01 : f32
      %26 = vector.broadcast %cst_19 : f32 to vector<16x1xf32>
      %27 = arith.divf %25, %26 : vector<16x1xf32>
      %28 = vector.broadcast %27 : vector<16x1xf32> to vector<16x32xf32>
      %29 = arith.subf %23, %28 : vector<16x32xf32>
      %30 = arith.mulf %29, %29 : vector<16x32xf32>
      %cst_20 = arith.constant dense<0.000000e+00> : vector<16xf32>
      %31 = vector.multi_reduction <add>, %30, %cst_20 [1] : vector<16x32xf32> to vector<16xf32>
      %32 = vector.shape_cast %31 : vector<16xf32> to vector<16x1xf32>
      %cst_21 = arith.constant 3.200000e+01 : f32
      %33 = vector.broadcast %cst_21 : f32 to vector<16x1xf32>
      %34 = arith.divf %32, %33 : vector<16x1xf32>
      %cst_22 = arith.constant 9.99999996E-13 : f32
      %35 = vector.broadcast %cst_22 : f32 to vector<16x1xf32>
      %36 = arith.addf %34, %35 : vector<16x1xf32>
      %37 = math.rsqrt %36 : vector<16x1xf32>
      %38 = vector.broadcast %37 : vector<16x1xf32> to vector<16x32xf32>
      %39 = arith.mulf %29, %38 : vector<16x32xf32>
      %c0_23 = arith.constant 0 : index
      %c0_24 = arith.constant 0 : index
      %40 = vector.load %arg5[%c0_23, %c0_24] : memref<1x32xf32, #tpu.memory_space<vmem>>, vector<1x32xf32>
      %41 = vector.broadcast %40 : vector<1x32xf32> to vector<16x32xf32>
      %42 = arith.mulf %39, %41 : vector<16x32xf32>
      %c0_25 = arith.constant 0 : index
      %c0_26 = arith.constant 0 : index
      %43 = vector.load %arg6[%c0_25, %c0_26] : memref<1x32xf32, #tpu.memory_space<vmem>>, vector<1x32xf32>
      %44 = vector.broadcast %43 : vector<1x32xf32> to vector<16x32xf32>
      %45 = arith.addf %42, %44 : vector<16x32xf32>
      %c0_27 = arith.constant 0 : index
      %c0_28 = arith.constant 0 : index
      %46 = vector.load %arg10[%c0_27, %c0_28] : memref<16x32xf32, #tpu.memory_space<vmem>>, vector<16x32xf32>
      tpu.vector_store %arg10[%c0_27, %c0_28], %45 {strides = array<i32>} : memref<16x32xf32, #tpu.memory_space<vmem>>, vector<16x32xf32>,
    } else {
    }
    %c0 = arith.constant 0 : index
    %c0_1 = arith.constant 0 : index
    %3 = vector.load %arg10[%c0, %c0_1] : memref<16x32xf32, #tpu.memory_space<vmem>>, vector<16x32xf32>
    %c0_2 = arith.constant 0 : index
    %c0_3 = arith.constant 0 : index
    %4 = vector.load %arg7[%c0_2, %c0_3] : memref<32x128xf32, #tpu.memory_space<vmem>>, vector<32x128xf32>
    %cst = arith.constant dense<0.000000e+00> : vector<16x128xf32>
    %5 = tpu.matmul %3, %4, %cst {dimension_numbers = #tpu.dot_dimension_numbers<[1], [0], [0], [1], [0, 0, 1, 1], [], []>} : vector<16x32xf32>, vector<32x128xf32>, vector<16x128xf32> -> vector<16x128xf32>
    %c0_4 = arith.constant 0 : index
    %c0_5 = arith.constant 0 : index
    %6 = vector.load %arg8[%c0_4, %c0_5] : memref<1x128xf32, #tpu.memory_space<vmem>>, vector<1x128xf32>
    %7 = vector.broadcast %6 : vector<1x128xf32> to vector<16x128xf32>
    %8 = arith.addf %5, %7 : vector<16x128xf32>
    %c0_6 = arith.constant 0 : index
    %c0_7 = arith.constant 0 : index
    %9 = vector.load %arg9[%c0_6, %c0_7] : memref<16x128xf32, #tpu.memory_space<vmem>>, vector<16x128xf32>
    tpu.vector_store %arg9[%c0_6, %c0_7], %8 {strides = array<i32>} : memref<16x128xf32, #tpu.memory_space<vmem>>, vector<16x128xf32>,
    return
  }
  func.func @transform_0(%arg0: i32, %arg1: i32) -> (i32, i32) {
    %c0_i32 = arith.constant 0 : i32
    %c0_i32_0 = arith.constant 0 : i32
    return %arg0, %c0_i32 : i32, i32
  }
  func.func @transform_1(%arg0: i32, %arg1: i32) -> (i32, i32) {
    %c0_i32 = arith.constant 0 : i32
    %c0_i32_0 = arith.constant 0 : i32
    %c0_i32_1 = arith.constant 0 : i32
    return %c0_i32, %c0_i32_0 : i32, i32
  }
  func.func @transform_2(%arg0: i32, %arg1: i32) -> (i32, i32) {
    %c0_i32 = arith.constant 0 : i32
    %c0_i32_0 = arith.constant 0 : i32
    %c0_i32_1 = arith.constant 0 : i32
    return %c0_i32, %c0_i32_0 : i32, i32
  }
  func.func @transform_3(%arg0: i32, %arg1: i32) -> (i32, i32) {
    %c0_i32 = arith.constant 0 : i32
    %c0_i32_0 = arith.constant 0 : i32
    %c0_i32_1 = arith.constant 0 : i32
    return %c0_i32, %c0_i32_0 : i32, i32
  }
  func.func @transform_4(%arg0: i32, %arg1: i32) -> (i32, i32) {
    %c0_i32 = arith.constant 0 : i32
    %c0_i32_0 = arith.constant 0 : i32
    %c0_i32_1 = arith.constant 0 : i32
    return %c0_i32, %c0_i32_0 : i32, i32
  }
  func.func @transform_5(%arg0: i32, %arg1: i32) -> (i32, i32) {
    %c0_i32 = arith.constant 0 : i32
    %c0_i32_0 = arith.constant 0 : i32
    %c0_i32_1 = arith.constant 0 : i32
    return %c0_i32, %c0_i32_0 : i32, i32
  }
  func.func @transform_6(%arg0: i32, %arg1: i32) -> (i32, i32) {
    %c0_i32 = arith.constant 0 : i32
    %c0_i32_0 = arith.constant 0 : i32
    %c0_i32_1 = arith.constant 0 : i32
    return %c0_i32, %c0_i32_0 : i32, i32
  }
  func.func @transform_7(%arg0: i32, %arg1: i32) -> (i32, i32) {
    %c0_i32 = arith.constant 0 : i32
    return %arg0, %arg1 : i32, i32
  }
}

</mosaic_0001>

<llo_original>
// kernel: tpu_custom_call.1
$region0: #{tpu_custom_call.1}
  #allocation0 [shape = 'u32[]', space=smem, size = 0x4, offset = 0x4, fixed_abs, tag = 'smem constant byte address 0x4 - core index']
  #allocation1 [shape = 'u32[72,128]{1,0:T(1,128)}', space=vmem, size = 0x9000, scoped, tag = 'internal scratch']
  #allocation2 [shape = 'f32[16,32]{1,0:T(8,128)}', space=vmem, size = 0x2000, scoped, tag = 'scratch operand']
  %s0 = inlined_call_operand.hbm [shape: f32[16,32], index: 0, kind: input, shape index: {}]
  %s1 = inlined_call_operand.hbm [shape: f32[32,32], index: 1, kind: input, shape index: {}]
  %s2 = inlined_call_operand.vmem [shape: f32[1,32], index: 2, kind: input, shape index: {}]
  %s3 = inlined_call_operand.vmem [shape: f32[1,32], index: 3, kind: input, shape index: {}]
  %s4 = inlined_call_operand.vmem [shape: f32[1,32], index: 4, kind: input, shape index: {}]
  %s5 = inlined_call_operand.hbm [shape: f32[32,128], index: 5, kind: input, shape index: {}]
  %s6 = inlined_call_operand.vmem [shape: f32[1,128], index: 6, kind: input, shape index: {}]
  %s7 = inlined_call_operand.hbm [shape: f32[16,128], index: 7, kind: output, shape index: {}]
  %s8 = sld [smem:[#allocation0]]
  $region54: #{tpu_custom_call.1} parent=0
    _
  %s10 = ssub.s32 1, %s8
  %s11 = scalar_select 0, %s10, %s8
  $region1: #{tpu_custom_call.1} parent=0
    #allocation3 [shape = 'u8[8192]{0}', space=vmem, size = 0x2000, scoped, tag = 'input window, operand 0, single buffered']
    #allocation4 [shape = 's32[1]{0}', space=sflag, size = 0x4, scoped, tag = 'scoped memory for tpu_custom_call.1']
    #allocation5 [shape = 's32[1]{0}', space=sflag, size = 0x4, scoped, tag = 'scoped memory for tpu_custom_call.1']
    #allocation6 [shape = 'u8[16384]{0}', space=vmem, size = 0x4000, scoped, tag = 'input window, operand 1, single buffered']
    #allocation7 [shape = 's32[1]{0}', space=sflag, size = 0x4, scoped, tag = 'scoped memory for tpu_custom_call.1']
    #allocation8 [shape = 'u8[16384]{0}', space=vmem, size = 0x4000, scoped, tag = 'input window, operand 5, single buffered']
    #allocation9 [shape = 'u8[8192]{0}', space=vmem, size = 0x2000, scoped, tag = 'output window, operand 0, single buffered']
    %12 = vsyncpa [#allocation4], 0
    %13 = vsyncpa [#allocation7], 0
    %14 = vsyncpa [#allocation5], 0
    // Predicated region
    $region2: #{tpu_custom_call.1} parent=1 // pred_check
      _
    $region3: #{tpu_custom_call.1} parent=1 // pred_check_branch
      %16 = sbr.rel (0) target = $region5
    $region4: #{tpu_custom_call.1} parent=1 // pred_region
      %18 = vsyncadd [#allocation4], 0
      %s19 = sshll.u32 %s0, 4
      %s20 = int_to_ptr.hbm [resolvable:$true] %s19
      %s21 = sshll.u32 [#allocation3], 4
      %s22 = int_to_ptr.vmem [resolvable:$true] %s21
      %27 = dma.hbm_to_vmem [thread:$0]  %s20, 256, %s22, [#allocation4], 128, 128, 8
    $region5: #{tpu_custom_call.1} parent=1 // pred_fallthru
      _
    // Predicated region
    $region6: #{tpu_custom_call.1} parent=1 // pred_check
      _
    $region7: #{tpu_custom_call.1} parent=1 // pred_check_branch
      %29 = sbr.rel (0) target = $region9
    $region8: #{tpu_custom_call.1} parent=1 // pred_region
      %31 = vsyncadd [#allocation7], 0
      %s32 = sshll.u32 %s1, 4
      %s33 = int_to_ptr.hbm [resolvable:$true] %s32
      %s34 = sshll.u32 [#allocation6], 4
      %s35 = int_to_ptr.vmem [resolvable:$true] %s34
      %40 = dma.hbm_to_vmem [thread:$0]  %s33, 512, %s35, [#allocation7], 128, 128, 8
    $region9: #{tpu_custom_call.1} parent=1 // pred_fallthru
      _
    // Predicated region
    $region10: #{tpu_custom_call.1} parent=1 // pred_check
      _
    $region11: #{tpu_custom_call.1} parent=1 // pred_check_branch
      %42 = sbr.rel (0) target = $region13
    $region12: #{tpu_custom_call.1} parent=1 // pred_region
      _
    $region13: #{tpu_custom_call.1} parent=1 // pred_fallthru
      _
    // Predicated region
    $region14: #{tpu_custom_call.1} parent=1 // pred_check
      _
    $region15: #{tpu_custom_call.1} parent=1 // pred_check_branch
      %44 = sbr.rel (0) target = $region17
    $region16: #{tpu_custom_call.1} parent=1 // pred_region
      _
    $region17: #{tpu_custom_call.1} parent=1 // pred_fallthru
      _
    // Predicated region
    $region18: #{tpu_custom_call.1} parent=1 // pred_check
      _
    $region19: #{tpu_custom_call.1} parent=1 // pred_check_branch
      %46 = sbr.rel (0) target = $region21
    $region20: #{tpu_custom_call.1} parent=1 // pred_region
      _
    $region21: #{tpu_custom_call.1} parent=1 // pred_fallthru
      _
    // Predicated region
    $region22: #{tpu_custom_call.1} parent=1 // pred_check
      _
    $region23: #{tpu_custom_call.1} parent=1 // pred_check_branch
      %48 = sbr.rel (0) target = $region25
    $region24: #{tpu_custom_call.1} parent=1 // pred_region
      %50 = vsyncadd [#allocation7], 0
      %s51 = sshll.u32 %s5, 4
      %s52 = int_to_ptr.hbm [resolvable:$true] %s51
      %s53 = sshll.u32 [#allocation8], 4
      %s54 = int_to_ptr.vmem [resolvable:$true] %s53
      %59 = dma.hbm_to_vmem [thread:$0]  %s52, 512, %s54, [#allocation7], 128, 128, 8
    $region25: #{tpu_custom_call.1} parent=1 // pred_fallthru
      _
    // Predicated region
    $region26: #{tpu_custom_call.1} parent=1 // pred_check
      _
    $region27: #{tpu_custom_call.1} parent=1 // pred_check_branch
      %61 = sbr.rel (0) target = $region29
    $region28: #{tpu_custom_call.1} parent=1 // pred_region
      _
    $region29: #{tpu_custom_call.1} parent=1 // pred_fallthru
      _
    // Predicated region
    $region30: #{tpu_custom_call.1} parent=1 // pred_check
      _
    $region31: #{tpu_custom_call.1} parent=1 // pred_check_branch
      %63 = sbr.rel (0) target = $region33
    $region32: #{tpu_custom_call.1} parent=1 // pred_region
      %65 = dma.done [#allocation4], 256
    $region33: #{tpu_custom_call.1} parent=1 // pred_fallthru
      _
    // Predicated region
    $region34: #{tpu_custom_call.1} parent=1 // pred_check
      _
    $region35: #{tpu_custom_call.1} parent=1 // pred_check_branch
      %67 = sbr.rel (0) target = $region37
    $region36: #{tpu_custom_call.1} parent=1 // pred_region
      %69 = dma.done [#allocation7], 512
    $region37: #{tpu_custom_call.1} parent=1 // pred_fallthru
      _
    // Predicated region
    $region38: #{tpu_custom_call.1} parent=1 // pred_check
      _
    $region39: #{tpu_custom_call.1} parent=1 // pred_check_branch
      %71 = sbr.rel (0) target = $region41
    $region40: #{tpu_custom_call.1} parent=1 // pred_region
      %73 = dma.done [#allocation7], 512
    $region41: #{tpu_custom_call.1} parent=1 // pred_fallthru
      _
    %p74 = scmp.eq.s32.totalorder 0, 0
    // Predicated region
    $region42: #{tpu_custom_call.1} parent=1 // pred_check
      %p75 = pneg %p74
    $region43: #{tpu_custom_call.1} parent=1 // pred_check_branch
      %77 = sbr.rel (%p75) target = $region45
    $region44: #{tpu_custom_call.1} parent=1 // pred_region
      %v78 = vld [vmem:[#allocation3] sm:$0xff]
      %v79 = vld [vmem:[#allocation3 + $0x8] sm:$0xff]
      %v80 = vld [vmem:[#allocation6] sm:$0xff]
      %v81 = vld [vmem:[#allocation6 + $0x8] sm:$0xff]
      %v82 = vld [vmem:[#allocation6 + $0x10] sm:$0xff]
      %v83 = vld [vmem:[#allocation6 + $0x18] sm:$0xff]
      %v84 = vld [vmem:[%s2] sm:$0x1]
      %v86 = vperm.slane %v84, 0
      %vm88 = vcmask 261120
      %v90 = vsel %vm88, %v78, 0
      %v93 = vsel %vm88, %v79, 0
      %95 = vmatpush.msra.mxu0 0.0
      %96 = vmatpush.msra.mxu0 0.0
      %97 = vmatpush.msra.mxu0 0.0
      %98 = vmatpush.msra.mxu0 0.0
      %99 = vmatpush.msra.mxu0 0.0
      %100 = vmatpush.msra.mxu0 0.0
      %101 = vmatpush.msra.mxu0 0.0
      %102 = vmatpush.msra.mxu0 0.0
      %103 = vmatpush.msra.mxu0 0.0
      %104 = vmatpush.msra.mxu0 0.0
      %105 = vmatpush.msra.mxu0 0.0
      %106 = vmatpush.msra.mxu0 0.0
      %107 = vmatpush.msra.mxu0 %v83
      %108 = vmatpush.msra.mxu0 %v82
      %109 = vmatpush.msra.mxu0 %v81
      %110 = vmatpush.msra.mxu0 %v80
      %111 = vmatmul.f32.gmra.mxu0 %v90
      %v112 = vpop.f32.mrf.mxu0
      %v113 = vadd.f32 %v86, %v112
      %114 = vmatmul.f32.gmra.mxu0 %v93
      %v115 = vpop.f32.mrf.mxu0
      %v116 = vadd.f32 %v86, %v115
      %117 = vdwg.mxu0
      %v118 = vmul.f32 %v113, 0.5
      %v119 = vmul.f32 %v116, 0.5
      %v120 = vmul.f32 %v113, 0.70710677
      %v121 = vmul.f32 %v116, 0.70710677
      %v122 = vmul.f32 %v120, %v120
      %v123 = vmin.f32 16.0, %v122
      %v124 = vmul.f32 %v123, 2.1237322e-06
      %v125 = vadd.f32 %v124, 0.00028619796
      %v126 = vmul.f32 %v123, %v125
      %v127 = vadd.f32 %v126, 0.0036580483
      %v128 = vmul.f32 %v123, %v127
      %v129 = vadd.f32 %v128, 0.05243302
      %v130 = vmul.f32 %v123, %v129
      %v131 = vadd.f32 %v130, 0.18741608
      %v132 = vmul.f32 %v123, %v131
      %v133 = vadd.f32 %v132, 1.1283791
      %v134 = vmul.f32 %v120, %v133
      %v135 = vmul.f32 %v123, 3.8918573e-05
      %v136 = vadd.f32 %v135, 0.001143296
      %v137 = vmul.f32 %v123, %v136
      %v138 = vadd.f32 %v137, 0.014752088
      %v139 = vmul.f32 %v123, %v138
      %v140 = vadd.f32 %v139, 0.112945676
      %v141 = vmul.f32 %v123, %v140
      %v142 = vadd.f32 %v141, 0.4994258
      %v143 = vmul.f32 %v123, %v142
      %v144 = vadd.f32 %v143, 1.0
      %v145 = vrcp.pop %v144
      %v146 = vmul.f32 %v144, %v145
      %v147 = vsub.f32 1.0, %v146
      %v148 = vmul.f32 %v145, %v147
      %v149 = vadd.f32 %v145, %v148
      %vm150 = vweird.f32 %v144
      %vm151 = vweird.f32 %v145
      %vm152 = vmor %vm150, %vm151
      %v153 = vsel %vm152, %v145, %v149
      %v154 = vand.u32 2147483647, %v144
      %vm155 = vcmp.eq.f32.partialorder %v154, 8.507059e+37
      %v156 = vand.u32 %v144, 2147483648
      %v157 = vor.u32 1.1754944e-38, %v156
      %v158 = vsel %vm155, %v157, %v153
      %v159 = vmul.f32 %v134, %v158
      %v160 = vmin.f32 %v159, 1.0
      %v161 = vmax.f32 %v160, -1.0
      %v162 = vmul.f32 %v121, %v121
      %v163 = vmin.f32 16.0, %v162
      %v164 = vmul.f32 %v163, 2.1237322e-06
      %v165 = vadd.f32 %v164, 0.00028619796
      %v166 = vmul.f32 %v163, %v165
      %v167 = vadd.f32 %v166, 0.0036580483
      %v168 = vmul.f32 %v163, %v167
      %v169 = vadd.f32 %v168, 0.05243302
      %v170 = vmul.f32 %v163, %v169
      %v171 = vadd.f32 %v170, 0.18741608
      %v172 = vmul.f32 %v163, %v171
      %v173 = vadd.f32 %v172, 1.1283791
      %v174 = vmul.f32 %v121, %v173
      %v175 = vmul.f32 %v163, 3.8918573e-05
      %v176 = vadd.f32 %v175, 0.001143296
      %v177 = vmul.f32 %v163, %v176
      %v178 = vadd.f32 %v177, 0.014752088
      %v179 = vmul.f32 %v163, %v178
      %v180 = vadd.f32 %v179, 0.112945676
      %v181 = vmul.f32 %v163, %v180
      %v182 = vadd.f32 %v181, 0.4994258
      %v183 = vmul.f32 %v163, %v182
      %v184 = vadd.f32 %v183, 1.0
      %v185 = vrcp.pop %v184
      %v186 = vmul.f32 %v184, %v185
      %v187 = vsub.f32 1.0, %v186
      %v188 = vmul.f32 %v185, %v187
      %v189 = vadd.f32 %v185, %v188
      %vm190 = vweird.f32 %v184
      %vm191 = vweird.f32 %v185
      %vm192 = vmor %vm190, %vm191
      %v193 = vsel %vm192, %v185, %v189
      %v194 = vand.u32 2147483647, %v184
      %vm195 = vcmp.eq.f32.partialorder %v194, 8.507059e+37
      %v196 = vand.u32 %v184, 2147483648
      %v197 = vor.u32 1.1754944e-38, %v196
      %v198 = vsel %vm195, %v197, %v193
      %v199 = vmul.f32 %v174, %v198
      %v200 = vmin.f32 %v199, 1.0
      %v201 = vmax.f32 %v200, -1.0
      %v202 = vadd.f32 %v161, 1.0
      %v203 = vadd.f32 %v201, 1.0
      %v204 = vmul.f32 %v118, %v202
      %v205 = vmul.f32 %v119, %v203
      %v206 = vsel %vm88, %v204, 0.0
      %207 = vadd.xlane.f32.xlu0 %v206
      %v208 = vpop.xlane.xlu0 %207
      %v209 = vsel %vm88, %v205, 0.0
      %210 = vadd.xlane.f32.xlu0 %v209
      %v211 = vpop.xlane.xlu0 %210
      %v212 = vrcp.pop 32.0
      %v213 = vmul.f32 32.0, %v212
      %v214 = vsub.f32 1.0, %v213
      %v215 = vmul.f32 %v212, %v214
      %v216 = vadd.f32 %v212, %v215
      %vm217 = vweird.f32 %v212
      %v218 = vsel %vm217, %v212, %v216
      %v219 = vmul.f32 %v208, %v218
      %v220 = vmul.f32 %v211, %v218
      %v221 = vsub.f32 %v204, %v219
      %v222 = vsub.f32 %v205, %v220
      %v223 = vmul.f32 %v221, %v221
      %v224 = vmul.f32 %v222, %v222
      %v225 = vsel %vm88, %v223, 0.0
      %226 = vadd.xlane.f32.xlu0 %v225
      %v227 = vpop.xlane.xlu0 %226
      %v228 = vsel %vm88, %v224, 0.0
      %229 = vadd.xlane.f32.xlu0 %v228
      %v230 = vpop.xlane.xlu0 %229
      %v231 = vmul.f32 %v227, %v218
      %v232 = vmul.f32 %v230, %v218
      %v233 = vadd.f32 %v231, 1e-12
      %v234 = vadd.f32 %v232, 1e-12
      %v235 = vrsqrt.pop %v233
      %v236 = vmul.f32 %v235, %v233
      %v237 = vmul.f32 %v236, %v235
      %v238 = vmul.f32 0.5, %v237
      %v239 = vsub.f32 1.5, %v238
      %v240 = vmul.f32 %v235, %v239
      %vm241 = vweird.f32 %v233
      %vm242 = vweird.f32 %v235
      %vm243 = vmor %vm241, %vm242
      %v244 = vsel %vm243, %v235, %v240
      %v245 = vrsqrt.pop %v234
      %v246 = vmul.f32 %v245, %v234
      %v247 = vmul.f32 %v246, %v245
      %v248 = vmul.f32 0.5, %v247
      %v249 = vsub.f32 1.5, %v248
      %v250 = vmul.f32 %v245, %v249
      %vm251 = vweird.f32 %v234
      %vm252 = vweird.f32 %v245
      %vm253 = vmor %vm251, %vm252
      %v254 = vsel %vm253, %v245, %v250
      %v255 = vmul.f32 %v221, %v244
      %v256 = vmul.f32 %v222, %v254
      %v257 = vld [vmem:[%s3] sm:$0x1]
      %v259 = vperm.slane %v257, 0
      %v261 = vmul.f32 %v255, %v259
      %v262 = vmul.f32 %v256, %v259
      %v263 = vld [vmem:[%s4] sm:$0x1]
      %v265 = vperm.slane %v263, 0
      %v267 = vadd.f32 %v261, %v265
      %v268 = vadd.f32 %v262, %v265
      %269 = vst.msk [vmem:[#allocation2] sm:$0xff] %vm88, %v267
      %270 = vst.msk [vmem:[#allocation2 + $0x8] sm:$0xff] %vm88, %v268
    $region45: #{tpu_custom_call.1} parent=1 // pred_fallthru
      _
    %v271 = vld [vmem:[#allocation2] sm:$0xff]
    %v272 = vld [vmem:[#allocation2 + $0x8] sm:$0xff]
    %v273 = vld [vmem:[#allocation8] sm:$0xff]
    %v274 = vld [vmem:[#allocation8 + $0x8] sm:$0xff]
    %v275 = vld [vmem:[#allocation8 + $0x10] sm:$0xff]
    %v276 = vld [vmem:[#allocation8 + $0x18] sm:$0xff]
    %v277 = vld [vmem:[%s6] sm:$0x1]
    %v279 = vperm.slane %v277, 0
    %vm281 = vcmask 261120
    %v283 = vsel %vm281, %v271, 0
    %v286 = vsel %vm281, %v272, 0
    %288 = vmatpush.msra.mxu0 0.0
    %289 = vmatpush.msra.mxu0 0.0
    %290 = vmatpush.msra.mxu0 0.0
    %291 = vmatpush.msra.mxu0 0.0
    %292 = vmatpush.msra.mxu0 0.0
    %293 = vmatpush.msra.mxu0 0.0
    %294 = vmatpush.msra.mxu0 0.0
    %295 = vmatpush.msra.mxu0 0.0
    %296 = vmatpush.msra.mxu0 0.0
    %297 = vmatpush.msra.mxu0 0.0
    %298 = vmatpush.msra.mxu0 0.0
    %299 = vmatpush.msra.mxu0 0.0
    %300 = vmatpush.msra.mxu0 %v276
    %301 = vmatpush.msra.mxu0 %v275
    %302 = vmatpush.msra.mxu0 %v274
    %303 = vmatpush.msra.mxu0 %v273
    %304 = vmatmul.f32.gmra.mxu0 %v283
    %v305 = vpop.f32.mrf.mxu0
    %v306 = vadd.f32 %v279, %v305
    %307 = vmatmul.f32.gmra.mxu0 %v286
    %v308 = vpop.f32.mrf.mxu0
    %v309 = vadd.f32 %v279, %v308
    %310 = vdwg.mxu0
    %311 = vst [vmem:[#allocation9] sm:$0xff] %v306
    %312 = vst [vmem:[#allocation9 + $0x8] sm:$0xff] %v309
    // Predicated region
    $region46: #{tpu_custom_call.1} parent=1 // pred_check
      _
    $region47: #{tpu_custom_call.1} parent=1 // pred_check_branch
      %314 = sbr.rel (0) target = $region49
    $region48: #{tpu_custom_call.1} parent=1 // pred_region
      %316 = vsyncadd [#allocation5], 0
      %s317 = sshll.u32 [#allocation9], 4
      %s318 = int_to_ptr.vmem [resolvable:$true] %s317
      %s319 = sshll.u32 %s7, 4
      %s320 = int_to_ptr.hbm [resolvable:$true] %s319
      %325 = dma.vmem_to_hbm [thread:$0]  %s318, 256, %s320, [#allocation5], 128, 128, 8
    $region49: #{tpu_custom_call.1} parent=1 // pred_fallthru
      _
    // Predicated region
    $region50: #{tpu_custom_call.1} parent=1 // pred_check
      _
    $region51: #{tpu_custom_call.1} parent=1 // pred_check_branch
      %327 = sbr.rel (0) target = $region53
    $region52: #{tpu_custom_call.1} parent=1 // pred_region
      %329 = dma.done [#allocation5], 256
    $region53: #{tpu_custom_call.1} parent=1 // pred_fallthru
      _
    %330 = vsyncpa [#allocation4], 1
    %331 = vsyncpa [#allocation7], 1
    %332 = vsyncpa [#allocation5], 1

</llo_original>
